<compile_context>
chip_gen: v7x
topology: tpu7x:2x2x1
jax: 0.10.0
libtpu: 0.0.40
codegen_flags: <defaults>
</compile_context>

<pallas_src>
import functools
import math

import numpy as np
import jax
import jax.numpy as jnp
from jax.experimental import pallas as pl
from jax.experimental.pallas import tpu as pltpu

# Matmul operands (activations / big weights) use bf16 on the MXU; f32 accumulate.
MM_DTYPE = jnp.bfloat16


# ----------------------------------------------------------------- hardware plan

def _tpu_generation():
    try:
        kind = jax.devices()[0].device_kind.lower()
    except Exception:
        return 6
    for g in (7, 6, 5):
        if str(g) in kind:
            return g
    return 4


def _vmem_limit_bytes():
    # ~25% headroom below physical VMEM (~48 MiB on v7x, ~96 MiB on v5e/v6e).
    try:
        return int(pltpu.get_tpu_info().vmem_capacity_bytes) * 3 // 4
    except Exception:
        return 48 * 1024 * 1024


def _round_up(x, m):
    return ((x + m - 1) // m) * m


def _plan_rows(n, gen):
    """Pad token count and pick the per-grid-step row block.

    v5e/v6e (128 MiB VMEM): big row blocks so expert weights are re-streamed less.
    v7x (64 MiB VMEM, 2 TensorCores): smaller blocks and always >=2 'parallel'
    row blocks so both cores get work."""
    base = 256 if gen >= 7 else 1024
    if n <= base:
        n_pad = _round_up(n, 16)
        nb = n_pad
    else:
        n_pad = _round_up(n, base)
        nb = base
    if gen >= 7 and n_pad // nb < 2:
        nb = max(8, n_pad // 2)
    return n_pad, nb


def _pick_vb(v):
    """Vocab (lane) block for the output projection: full, or a 128-multiple."""
    if v <= 2048:
        return v
    for cand in (2048, 1024, 512, 256, 128):
        if v % cand == 0:
            return cand
    return v


def _lane_budget(gen):
    return 4096 if gen >= 7 else 8192


def _pick_lb(n_leaves, he, gen):
    """Leaf block so LB*HE lanes stay VMEM-friendly (n_leaves is a power of 2)."""
    budget = _lane_budget(gen)
    if n_leaves * he <= budget:
        return n_leaves
    lb = max(1, budget // he)
    lb = 2 ** int(math.floor(math.log2(lb)))
    return max(1, min(lb, n_leaves))


def _pick_kb(k_nodes, h_dim, gen):
    """Node block so KB*H lanes stay VMEM-friendly (K is padded to a multiple)."""
    budget = _lane_budget(gen)
    if k_nodes * h_dim <= budget:
        return k_nodes
    return max(1, budget // h_dim)


# --------------------------------------------------------------------- helpers

def _gelu(x):
    # TODO(synk): torch nn.GELU() defaults to the exact erf form; tanh
    # approximation is used in-kernel (erf may not lower through Mosaic).
    c = math.sqrt(2.0 / math.pi)
    return 0.5 * x * (1.0 + jnp.tanh(c * (x + 0.044715 * x * x * x)))


def _path_matrices_np(depth):
    """A_left/A_right (K, L): node k lies on leaf l's path taking left/right."""
    k_nodes, n_leaves = 2 ** depth - 1, 2 ** depth
    a_left = np.zeros((k_nodes, n_leaves), np.float32)
    a_right = np.zeros((k_nodes, n_leaves), np.float32)
    for leaf in range(n_leaves):
        for d in range(depth):
            node = 2 ** d - 1 + (leaf >> (depth - d))
            if (leaf >> (depth - 1 - d)) & 1:
                a_right[node, leaf] = 1.0
            else:
                a_left[node, leaf] = 1.0
    return a_left, a_right


def _blocked_path_matrices(depth, kbs, n_kblk, l_pad):
    """Per node-block [A_left_rows ; A_right_rows], zero-padded (lane-dense L)."""
    k_nodes, n_leaves = 2 ** depth - 1, 2 ** depth
    a_left, a_right = _path_matrices_np(depth)
    k_pad = kbs * n_kblk
    al = np.zeros((k_pad, l_pad), np.float32)
    ar = np.zeros((k_pad, l_pad), np.float32)
    al[:k_nodes, :n_leaves] = a_left
    ar[:k_nodes, :n_leaves] = a_right
    paths = np.zeros((n_kblk, 2 * kbs, l_pad), np.float32)
    for b in range(n_kblk):
        paths[b, :kbs] = al[b * kbs:(b + 1) * kbs]
        paths[b, kbs:] = ar[b * kbs:(b + 1) * kbs]
    return jnp.asarray(paths)


# --------------------------------------------------------------------- kernels

def decision_leaf_kernel(x_ref, w1_ref, b1_ref, w2f_ref, b2_ref, pool_ref,
                         path_ref, out_ref, acc_ref, *, n_leaves):
    """One node-block of one tree -> accumulate leaf log-probs; finalize to
    lane-dense (NB, L_pad) probabilities on the last node block."""
    kb = pl.program_id(2)

    @pl.when(kb == 0)
    def _():
        acc_ref[...] = jnp.zeros_like(acc_ref)

    x = x_ref[...]                                                    # (NB, E) bf16
    h = jnp.dot(x, w1_ref[...], preferred_element_type=jnp.float32) + b1_ref[...]
    h = _gelu(h)                                                      # (NB, KB*H) f32
    # per-node second layer: logit_left - logit_right via broadcast multiply by
    # the flattened weight difference + constant 0/1 pooling matmul (no dense
    # block-diagonal slab, no K x wasted MXU FLOPs).
    hw = (h * w2f_ref[...]).astype(MM_DTYPE)                          # (NB, KB*H)
    d = (jnp.dot(hw, pool_ref[...], preferred_element_type=jnp.float32)
         + b2_ref[...])                                               # (NB, KB)
    # shared log-sigmoid: log softmax[...,0] = min(d,0)-t, log softmax[...,1] = min(-d,0)-t
    t_log = jnp.log(1.0 + jnp.exp(-jnp.abs(d)))
    lp = jnp.concatenate([jnp.minimum(d, 0.0) - t_log,
                          jnp.minimum(-d, 0.0) - t_log], axis=-1)     # (NB, 2*KB)
    acc_ref[...] += jnp.dot(lp, path_ref[...],
                            preferred_element_type=jnp.float32)       # (NB, L_pad)

    @pl.when(kb == pl.num_programs(2) - 1)
    def _():
        lane = jax.lax.broadcasted_iota(jnp.int32, out_ref.shape, 1)
        out_ref[...] = jnp.where(lane < n_leaves, jnp.exp(acc_ref[...]), 0.0)


def expert_level_kernel(x_ref, p_ref, w1_ref, b1_ref, w2_ref, out_ref, acc_ref,
                        *, lb, he, ew_dtype):
    """One (tree, leaf-block) of fused leaf experts, weighted by the routing
    probability (expert-skip mask + per-tree confidence normalisation already
    folded in) and accumulated over (tree, leaf-block) into the level output."""
    t = pl.program_id(1)
    g = pl.program_id(2)

    @pl.when(jnp.logical_and(t == 0, g == 0))
    def _():
        acc_ref[...] = jnp.zeros_like(acc_ref)

    x = x_ref[...]                                                    # (NB, E)  bf16
    p = p_ref[...].astype(ew_dtype)                                   # (NB, LB)
    h = jnp.dot(x, w1_ref[...], preferred_element_type=jnp.float32) + b1_ref[...]
    h = _gelu(h.astype(ew_dtype))                                     # (NB, LB*HE)
    # Broadcast each leaf's routing prob over its HE lanes with static slices
    # (no Kronecker-expansion matmul); append p as extra contraction lanes so the
    # p-weighted bias rides the same matmul (w2_ref rows = [W2 ; b2]).
    pieces = [h[:, l * he:(l + 1) * he] * p[:, l:l + 1] for l in range(lb)]
    pieces.append(p)
    hw = jnp.concatenate(pieces, axis=-1).astype(MM_DTYPE)            # (NB, LB*HE+LB)
    acc_ref[...] += jnp.dot(hw, w2_ref[...], preferred_element_type=jnp.float32)

    @pl.when(jnp.logical_and(t == pl.num_programs(1) - 1,
                             g == pl.num_programs(2) - 1))
    def _():
        out_ref[...] = acc_ref[...].astype(out_ref.dtype)


def projection_kernel(x_ref, w_ref, b_ref, o_ref):
    o_ref[...] = (jnp.dot(x_ref[...], w_ref[...],
                          preferred_element_type=jnp.float32)
                  + b_ref[...]).astype(o_ref.dtype)


# ------------------------------------------------------------------- wrappers

def run_decision_level(x_mm, lvl, nb, vmem_limit):
    np_rows, e = x_mm.shape
    t_trees, n_kblk, _, kbh = lvl['w1f'].shape
    kbs = lvl['b2d'].shape[-1]
    l_pad = lvl['paths'].shape[-1]
    kernel = functools.partial(decision_leaf_kernel, n_leaves=lvl['n_leaves'])
    return pl.pallas_call(
        kernel,
        out_shape=jax.ShapeDtypeStruct((t_trees, np_rows, l_pad), jnp.float32),
        grid=(t_trees, np_rows // nb, n_kblk),
        in_specs=[
            pl.BlockSpec((nb, e), lambda t, n, k: (n, 0)),
            pl.BlockSpec((None, None, e, kbh), lambda t, n, k: (t, k, 0, 0)),
            pl.BlockSpec((None, None, 1, kbh), lambda t, n, k: (t, k, 0, 0)),
            pl.BlockSpec((None, None, 1, kbh), lambda t, n, k: (t, k, 0, 0)),
            pl.BlockSpec((None, None, 1, kbs), lambda t, n, k: (t, k, 0, 0)),
            pl.BlockSpec((kbh, kbs), lambda t, n, k: (0, 0)),
            pl.BlockSpec((None, 2 * kbs, l_pad), lambda t, n, k: (k, 0, 0)),
        ],
        out_specs=pl.BlockSpec((None, nb, l_pad), lambda t, n, k: (t, n, 0)),
        scratch_shapes=[pltpu.VMEM((nb, l_pad), jnp.float32)],
        compiler_params=pltpu.CompilerParams(
            dimension_semantics=("parallel", "parallel", "arbitrary"),
            vmem_limit_bytes=vmem_limit),
    )(x_mm, lvl['w1f'], lvl['b1f'], lvl['w2f'], lvl['b2d'], lvl['pool'],
      lvl['paths'])


def run_expert_level(x_mm, p_blk, lvl, nb, vmem_limit, ew_dtype):
    np_rows, e = x_mm.shape
    t_trees, g_blocks, _, lbh = lvl['w1e'].shape
    lb, he = lvl['lb'], lvl['he']
    o_dim = lvl['w2a'].shape[-1]
    kernel = functools.partial(expert_level_kernel, lb=lb, he=he, ew_dtype=ew_dtype)
    return pl.pallas_call(
        kernel,
        out_shape=jax.ShapeDtypeStruct((np_rows, o_dim), MM_DTYPE),
        grid=(np_rows // nb, t_trees, g_blocks),
        in_specs=[
            pl.BlockSpec((nb, e), lambda n, t, g: (n, 0)),
            pl.BlockSpec((None, None, nb, lb), lambda n, t, g: (t, g, n, 0)),
            pl.BlockSpec((None, None, e, lbh), lambda n, t, g: (t, g, 0, 0)),
            pl.BlockSpec((None, None, 1, lbh), lambda n, t, g: (t, g, 0, 0)),
            pl.BlockSpec((None, None, lbh + lb, o_dim), lambda n, t, g: (t, g, 0, 0)),
        ],
        out_specs=pl.BlockSpec((nb, o_dim), lambda n, t, g: (n, 0)),
        scratch_shapes=[pltpu.VMEM((nb, o_dim), jnp.float32)],
        compiler_params=pltpu.CompilerParams(
            dimension_semantics=("parallel", "arbitrary", "arbitrary"),
            vmem_limit_bytes=vmem_limit),
    )(x_mm, p_blk, lvl['w1e'], lvl['b1e'], lvl['w2a'])


def run_projection(y, w, b, nb, vmem_limit):
    np_rows, o_dim = y.shape
    v = w.shape[-1]
    v_pad = v if v <= 2048 else _round_up(v, 128)
    if v_pad != v:
        w = jnp.pad(w, ((0, 0), (0, v_pad - v)))
        b = jnp.pad(b, ((0, 0), (0, v_pad - v)))
    vb = _pick_vb(v_pad)
    out = pl.pallas_call(
        projection_kernel,
        out_shape=jax.ShapeDtypeStruct((np_rows, v_pad), MM_DTYPE),
        grid=(np_rows // nb, v_pad // vb),
        in_specs=[
            pl.BlockSpec((nb, o_dim), lambda n, vv: (n, 0)),
            pl.BlockSpec((o_dim, vb), lambda n, vv: (0, vv)),
            pl.BlockSpec((1, vb), lambda n, vv: (0, vv)),
        ],
        out_specs=pl.BlockSpec((nb, vb), lambda n, vv: (n, vv)),
        compiler_params=pltpu.CompilerParams(
            dimension_semantics=("parallel", "parallel"),
            vmem_limit_bytes=vmem_limit),
    )(y, w, b)
    return out[:, :v] if v_pad != v else out


# ------------------------------------------------------ routing glue (plain JAX)

def topk_sparsify(probs, k):
    """Exact torch.topk + scatter + renormalize (padded lanes stay zero)."""
    t, n, _ = probs.shape
    vals, idx = jax.lax.top_k(probs, k)                                # (T, N, k)
    ti = jnp.arange(t)[:, None, None]
    ni = jnp.arange(n)[None, :, None]
    sparse = jnp.zeros_like(probs).at[ti, ni, idx].set(vals)
    return sparse / (jnp.sum(sparse, axis=-1, keepdims=True) + 1e-8)


def forest_forward(x_mm, params, cfg, n_real, nb, vmem_limit, ew_dtype):
    np_rows = x_mm.shape[0]
    level_outputs, level_confs = [], []
    for level in cfg['levels']:
        lvl = params[level]
        n_leaves = lvl['n_leaves']
        leaf_p = run_decision_level(x_mm, lvl, nb, vmem_limit)         # (T, NP, Lp)
        if cfg['top_k'] is not None and cfg['top_k'] < n_leaves:
            leaf_p = topk_sparsify(leaf_p, cfg['top_k'])
        # Reference skips each leaf expert independently when that leaf's prob
        # (post top-k, max over the batch) is < 0.001 -> per-(tree, leaf) mask,
        # computed over real rows only.
        active = jnp.max(leaf_p[:, :n_real, :], axis=1, keepdims=True) >= 1e-3
        conf = jnp.max(leaf_p, axis=-1)                                # (T, NP)
        norm = conf / (jnp.sum(conf, axis=0, keepdims=True) + 1e-8)    # (T, NP)
        # fold skip mask + per-tree confidence weights into the probs so the
        # expert kernel accumulates the level output (NP, O) directly over trees.
        p_eff = jnp.where(active, leaf_p, 0.0) * norm[..., None]       # (T, NP, Lp)
        # drop lane padding and reorganise to (T, G, NP, LB) (full-dim blocks).
        t_trees = p_eff.shape[0]
        g_blocks = lvl['w1e'].shape[1]
        p_blk = (p_eff[..., :n_leaves]
                 .reshape(t_trees, np_rows, g_blocks, lvl['lb'])
                 .transpose(0, 2, 1, 3))
        level_outputs.append(
            run_expert_level(x_mm, p_blk, lvl, nb, vmem_limit, ew_dtype))
        level_confs.append(jnp.mean(conf, axis=0))                     # (NP,)
    all_out = jnp.stack(level_outputs, axis=1).astype(jnp.float32)     # (NP, 3, O)
    all_confs = jnp.stack(level_confs, axis=1)                         # (NP, 3)
    # Reference: softmax over a width-1 axis -> weights identically 1.0 (kept).
    meta_logits = all_confs @ params['meta_w'] + params['meta_b']      # (NP, 1)
    meta_w = jax.nn.softmax(meta_logits, axis=1)[..., None]            # (NP, 1, 1)
    return jnp.sum(all_out * meta_w, axis=1)                           # (NP, O)


def em_tree_llm_forward(tokens, params, cfg):
    gen = _tpu_generation()
    vmem_limit = _vmem_limit_bytes()
    ew_dtype = MM_DTYPE if gen >= 6 else jnp.float32   # bf16 VPU/EUP only on v6e+
    b, s = tokens.shape
    tok_emb = params['tok_emb'][tokens]                                # (B, S, E)
    pos_emb = params['pos_emb'][:, :s, :]                              # (1, S, E)
    x = tok_emb + pos_emb
    n_real = b * s
    x2d = x.reshape(n_real, x.shape[-1])
    n_pad, nb = _plan_rows(n_real, gen)
    if n_pad != n_real:
        x2d = jnp.pad(x2d, ((0, n_pad - n_real), (0, 0)))
    x_mm = x2d.astype(MM_DTYPE)
    forest_out = forest_forward(x_mm, params, cfg, n_real, nb, vmem_limit, ew_dtype)
    logits = run_projection(forest_out.astype(MM_DTYPE), params['out_w'],
                            params['out_b'], nb, vmem_limit)           # bf16 logits
    return logits[:n_real].reshape(b, s, -1)                           # (B, S, V)


# ------------------------------------------------------------------ parameters

def fuse_level(depth, dec_w1, dec_b1, dec_w2, dec_b2,
               exp_w1, exp_b1, exp_w2, exp_b2, *, gen):
    """Pack per-node / per-leaf torch-style weights into lane-dense fused slabs."""
    t_trees, k_nodes, e_dim, h_dim = dec_w1.shape
    n_leaves, he = exp_w1.shape[1], exp_w1.shape[3]
    o_dim = exp_w2.shape[-1]

    # ---- decision nodes: fused first layer, node-blocked ----
    kbs = _pick_kb(k_nodes, h_dim, gen)
    k_pad = _round_up(k_nodes, kbs)
    n_kblk = k_pad // kbs
    if k_pad != k_nodes:                       # zero-padded nodes contribute 0
        pad = k_pad - k_nodes
        dec_w1 = jnp.pad(dec_w1, ((0, 0), (0, pad), (0, 0), (0, 0)))
        dec_b1 = jnp.pad(dec_b1, ((0, 0), (0, pad), (0, 0)))
        dec_w2 = jnp.pad(dec_w2, ((0, 0), (0, pad), (0, 0), (0, 0)))
        dec_b2 = jnp.pad(dec_b2, ((0, 0), (0, pad), (0, 0)))
    w1f = (dec_w1.reshape(t_trees, n_kblk, kbs, e_dim, h_dim)
           .transpose(0, 1, 3, 2, 4)
           .reshape(t_trees, n_kblk, e_dim, kbs * h_dim))
    b1f = dec_b1.reshape(t_trees, n_kblk, 1, kbs * h_dim)
    w2diff = dec_w2[..., 0] - dec_w2[..., 1]                           # (T, Kp, H)
    w2f = w2diff.reshape(t_trees, n_kblk, 1, kbs * h_dim)
    b2d = (dec_b2[..., 0] - dec_b2[..., 1]).reshape(t_trees, n_kblk, 1, kbs)
    # shared constant: sums each node's H lanes -> per-node logit difference
    pool = np.kron(np.eye(kbs, dtype=np.float32), np.ones((h_dim, 1), np.float32))
    l_pad = _round_up(n_leaves, 128)                                   # lane-dense
    paths = _blocked_path_matrices(depth, kbs, n_kblk, l_pad)

    # ---- leaf experts: LB leaves fused per grid step, bias folded into W2 ----
    lb = _pick_lb(n_leaves, he, gen)
    g_blocks = n_leaves // lb
    w1e = (exp_w1.reshape(t_trees, g_blocks, lb, e_dim, he)
           .transpose(0, 1, 3, 2, 4)
           .reshape(t_trees, g_blocks, e_dim, lb * he))
    b1e = exp_b1.reshape(t_trees, g_blocks, 1, lb * he)
    w2e = exp_w2.reshape(t_trees, g_blocks, lb * he, o_dim)
    b2e = exp_b2.reshape(t_trees, g_blocks, lb, o_dim)
    w2a = jnp.concatenate([w2e, b2e], axis=2)                          # [W2 ; b2]

    return {
        'depth': depth, 'n_leaves': n_leaves, 'lb': lb, 'he': he,
        'w1f': w1f.astype(MM_DTYPE), 'b1f': b1f,
        'w2f': w2f, 'b2d': b2d,
        'pool': jnp.asarray(pool).astype(MM_DTYPE),
        'paths': paths,
        'w1e': w1e.astype(MM_DTYPE), 'b1e': b1e,
        'w2a': w2a.astype(MM_DTYPE),
    }


def init_params(key, cfg):
    gen = _tpu_generation()
    e_dim, o_dim, v = cfg['embedding_dim'], cfg['output_dim'], cfg['vocab_size']
    n_levels = len(cfg['levels'])
    key_iter = iter(jax.random.split(key, 256))

    def normal(shape):
        return 0.02 * jax.random.normal(next(key_iter), shape, jnp.float32)

    params = {
        'tok_emb': normal((v, e_dim)),
        # nn.Parameter position embedding: Module.apply never visits bare
        # Parameters -> it keeps its torch.zeros init.
        'pos_emb': jnp.zeros((1, cfg['context_length'], e_dim), jnp.float32),
        'out_w': normal((o_dim, v)).astype(MM_DTYPE),
        'out_b': jnp.zeros((1, v), jnp.float32),
        'meta_w': normal((n_levels, 1)),
        'meta_b': jnp.zeros((1,), jnp.float32),
    }
    for level in cfg['levels']:
        if level == 'coarse':
            depth = max(2, cfg['tree_depth'] - 2)
            t_trees = max(2, cfg['num_trees'] // 4)
            h_dim = e_dim // 2
        elif level == 'medium':
            depth = cfg['tree_depth']
            t_trees = cfg['num_trees']
            h_dim = e_dim
        else:  # fine
            depth = min(8, cfg['tree_depth'] + 2)
            t_trees = max(2, cfg['num_trees'] * 2)
            h_dim = e_dim * 2
        k_nodes, n_leaves, he = 2 ** depth - 1, 2 ** depth, 2 * e_dim
        dec_w1 = normal((t_trees, k_nodes, e_dim, h_dim))
        dec_b1 = jnp.zeros((t_trees, k_nodes, h_dim), jnp.float32)
        dec_w2 = normal((t_trees, k_nodes, h_dim, 2))
        dec_b2 = jnp.zeros((t_trees, k_nodes, 2), jnp.float32)
        exp_w1 = normal((t_trees, n_leaves, e_dim, he))
        exp_b1 = jnp.zeros((t_trees, n_leaves, he), jnp.float32)
        exp_w2 = normal((t_trees, n_leaves, he, o_dim))
        exp_b2 = jnp.zeros((t_trees, n_leaves, o_dim), jnp.float32)
        params[level] = fuse_level(depth, dec_w1, dec_b1, dec_w2, dec_b2,
                                   exp_w1, exp_b1, exp_w2, exp_b2, gen=gen)
    return params


if __name__ == "__main__":
    cfg = dict(
        vocab_size=64,
        context_length=16,
        embedding_dim=32,
        output_dim=32,
        num_trees=4,
        tree_depth=3,
        top_k=4,
        levels=('coarse', 'medium', 'fine'),
    )
    key = jax.random.PRNGKey(0)
    pkey, dkey = jax.random.split(key)
    params = init_params(pkey, cfg)

    B, S = 2, 8
    tokens = jax.random.randint(dkey, (B, S), 0, cfg['vocab_size'], dtype=jnp.int32)

    logits = em_tree_llm_forward(tokens, params, cfg)
    logits = jax.block_until_ready(logits)

    assert logits.shape == (B, S, cfg['vocab_size']), logits.shape
    assert bool(jnp.all(jnp.isfinite(logits.astype(jnp.float32))))
    print("KERNEL_OK")
</pallas_src>

<mosaic_0001>
module attributes {stable_mosaic.version = 11 : i64} {
  func.func @decision_leaf_kernel(%arg0: i32, %arg1: i32, %arg2: i32, %arg3: memref<16x32xbf16, #tpu.memory_space<vmem>>, %arg4: memref<1x1x32x48xbf16, #tpu.memory_space<vmem>>, %arg5: memref<1x1x1x48xf32, #tpu.memory_space<vmem>>, %arg6: memref<1x1x1x48xf32, #tpu.memory_space<vmem>>, %arg7: memref<1x1x1x3xf32, #tpu.memory_space<vmem>>, %arg8: memref<48x3xbf16, #tpu.memory_space<vmem>>, %arg9: memref<1x6x128xf32, #tpu.memory_space<vmem>>, %arg10: memref<1x16x128xf32, #tpu.memory_space<vmem>>, %arg11: memref<16x128xf32, #tpu.memory_space<vmem>>) attributes {dimension_semantics = [#tpu.dimension_semantics<parallel>, #tpu.dimension_semantics<parallel>, #tpu.dimension_semantics<arbitrary>], iteration_bounds = array<i64: 2, 1, 1>, scalar_prefetch = 0 : i64, scratch_operands = 1 : i64, tpu.core_type = #tpu.core_type<tc>, window_params = [{transform_indices = @transform_0, window_bounds = array<i64: 16, 32>}, {transform_indices = @transform_1, window_bounds = array<i64: 1, 1, 32, 48>}, {transform_indices = @transform_2, window_bounds = array<i64: 1, 1, 1, 48>}, {transform_indices = @transform_3, window_bounds = array<i64: 1, 1, 1, 48>}, {transform_indices = @transform_4, window_bounds = array<i64: 1, 1, 1, 3>}, {pipeline_mode = #tpu.pipeline_mode<synchronous>, transform_indices = @transform_5, window_bounds = array<i64: 48, 3>}, {transform_indices = @transform_6, window_bounds = array<i64: 1, 6, 128>}, {transform_indices = @transform_7, window_bounds = array<i64: 1, 16, 128>}]} {
    %c0_i32 = arith.constant 0 : i32
    %0 = arith.cmpi eq, %arg2, %c0_i32 : i32
    %1 = arith.extui %0 : i1 to i32
    %c0_i32_0 = arith.constant 0 : i32
    %2 = arith.cmpi ne, %1, %c0_i32_0 : i32
    scf.if %2 {
      %cst_40 = arith.constant 0.000000e+00 : f32
      %60 = vector.broadcast %cst_40 : f32 to vector<16x128xf32>
      %c0_41 = arith.constant 0 : index
      %c0_42 = arith.constant 0 : index
      %61 = vector.load %arg11[%c0_41, %c0_42] : memref<16x128xf32, #tpu.memory_space<vmem>>, vector<16x128xf32>
      tpu.vector_store %arg11[%c0_41, %c0_42], %60 {strides = array<i32>} : memref<16x128xf32, #tpu.memory_space<vmem>>, vector<16x128xf32>,
    } else {
    }
    %c0 = arith.constant 0 : index
    %c0_1 = arith.constant 0 : index
    %3 = vector.load %arg3[%c0, %c0_1] : memref<16x32xbf16, #tpu.memory_space<vmem>>, vector<16x32xbf16>
    %c0_2 = arith.constant 0 : index
    %c0_3 = arith.constant 0 : index
    %c0_4 = arith.constant 0 : index
    %c0_5 = arith.constant 0 : index
    %4 = vector.load %arg4[%c0_2, %c0_3, %c0_4, %c0_5] : memref<1x1x32x48xbf16, #tpu.memory_space<vmem>>, vector<1x1x32x48xbf16>
    %5 = vector.shape_cast %4 : vector<1x1x32x48xbf16> to vector<32x48xbf16>
    %cst = arith.constant dense<0.000000e+00> : vector<16x48xf32>
    %6 = tpu.matmul %3, %5, %cst {dimension_numbers = #tpu.dot_dimension_numbers<[1], [0], [0], [1], [0, 0, 1, 1], [], []>} : vector<16x32xbf16>, vector<32x48xbf16>, vector<16x48xf32> -> vector<16x48xf32>
    %c0_6 = arith.constant 0 : index
    %c0_7 = arith.constant 0 : index
    %c0_8 = arith.constant 0 : index
    %c0_9 = arith.constant 0 : index
    %7 = vector.load %arg5[%c0_6, %c0_7, %c0_8, %c0_9] : memref<1x1x1x48xf32, #tpu.memory_space<vmem>>, vector<1x1x1x48xf32>
    %8 = vector.shape_cast %7 : vector<1x1x1x48xf32> to vector<1x48xf32>
    %9 = vector.broadcast %8 : vector<1x48xf32> to vector<16x48xf32>
    %10 = arith.addf %6, %9 : vector<16x48xf32>
    %cst_10 = arith.constant 5.000000e-01 : f32
    %11 = vector.broadcast %cst_10 : f32 to vector<16x48xf32>
    %12 = arith.mulf %11, %10 : vector<16x48xf32>
    %cst_11 = arith.constant 4.471500e-02 : f32
    %13 = vector.broadcast %cst_11 : f32 to vector<16x48xf32>
    %14 = arith.mulf %13, %10 : vector<16x48xf32>
    %15 = arith.mulf %14, %10 : vector<16x48xf32>
    %16 = arith.mulf %15, %10 : vector<16x48xf32>
    %17 = arith.addf %10, %16 : vector<16x48xf32>
    %cst_12 = arith.constant 0.797884583 : f32
    %18 = vector.broadcast %cst_12 : f32 to vector<16x48xf32>
    %19 = arith.mulf %18, %17 : vector<16x48xf32>
    %20 = math.tanh %19 : vector<16x48xf32>
    %cst_13 = arith.constant 1.000000e+00 : f32
    %21 = vector.broadcast %cst_13 : f32 to vector<16x48xf32>
    %22 = arith.addf %21, %20 : vector<16x48xf32>
    %23 = arith.mulf %12, %22 : vector<16x48xf32>
    %c0_14 = arith.constant 0 : index
    %c0_15 = arith.constant 0 : index
    %c0_16 = arith.constant 0 : index
    %c0_17 = arith.constant 0 : index
    %24 = vector.load %arg6[%c0_14, %c0_15, %c0_16, %c0_17] : memref<1x1x1x48xf32, #tpu.memory_space<vmem>>, vector<1x1x1x48xf32>
    %25 = vector.shape_cast %24 : vector<1x1x1x48xf32> to vector<1x48xf32>
    %26 = vector.broadcast %25 : vector<1x48xf32> to vector<16x48xf32>
    %27 = arith.mulf %23, %26 : vector<16x48xf32>
    %28 = arith.truncf %27 : vector<16x48xf32> to vector<16x48xbf16>
    %c0_18 = arith.constant 0 : index
    %c0_19 = arith.constant 0 : index
    %29 = vector.load %arg8[%c0_18, %c0_19] : memref<48x3xbf16, #tpu.memory_space<vmem>>, vector<48x3xbf16>
    %cst_20 = arith.constant dense<0.000000e+00> : vector<16x3xf32>
    %30 = tpu.matmul %28, %29, %cst_20 {dimension_numbers = #tpu.dot_dimension_numbers<[1], [0], [0], [1], [0, 0, 1, 1], [], []>} : vector<16x48xbf16>, vector<48x3xbf16>, vector<16x3xf32> -> vector<16x3xf32>
    %c0_21 = arith.constant 0 : index
    %c0_22 = arith.constant 0 : index
    %c0_23 = arith.constant 0 : index
    %c0_24 = arith.constant 0 : index
    %31 = vector.load %arg7[%c0_21, %c0_22, %c0_23, %c0_24] : memref<1x1x1x3xf32, #tpu.memory_space<vmem>>, vector<1x1x1x3xf32>
    %32 = vector.shape_cast %31 : vector<1x1x1x3xf32> to vector<1x3xf32>
    %33 = vector.broadcast %32 : vector<1x3xf32> to vector<16x3xf32>
    %34 = arith.addf %30, %33 : vector<16x3xf32>
    %35 = math.absf %34 : vector<16x3xf32>
    %cst_25 = arith.constant 0.000000e+00 : f32
    %36 = vector.broadcast %cst_25 : f32 to vector<16x3xf32>
    %37 = arith.subf %36, %35 : vector<16x3xf32>
    %38 = math.exp %37 : vector<16x3xf32>
    %cst_26 = arith.constant 1.000000e+00 : f32
    %39 = vector.broadcast %cst_26 : f32 to vector<16x3xf32>
    %40 = arith.addf %39, %38 : vector<16x3xf32>
    %41 = math.log %40 : vector<16x3xf32>
    %cst_27 = arith.constant 0.000000e+00 : f32
    %42 = vector.broadcast %cst_27 : f32 to vector<16x3xf32>
    %43 = arith.minimumf %34, %42 : vector<16x3xf32>
    %44 = arith.subf %43, %41 : vector<16x3xf32>
    %cst_28 = arith.constant 0.000000e+00 : f32
    %45 = vector.broadcast %cst_28 : f32 to vector<16x3xf32>
    %46 = arith.subf %45, %34 : vector<16x3xf32>
    %cst_29 = arith.constant 0.000000e+00 : f32
    %47 = vector.broadcast %cst_29 : f32 to vector<16x3xf32>
    %48 = arith.minimumf %46, %47 : vector<16x3xf32>
    %49 = arith.subf %48, %41 : vector<16x3xf32>
    %50 = tpu.concatenate %44, %49 in 1 : vector<16x3xf32>, vector<16x3xf32> -> vector<16x6xf32>
    %c0_30 = arith.constant 0 : index
    %c0_31 = arith.constant 0 : index
    %51 = vector.load %arg11[%c0_30, %c0_31] : memref<16x128xf32, #tpu.memory_space<vmem>>, vector<16x128xf32>
    %c0_32 = arith.constant 0 : index
    %c0_33 = arith.constant 0 : index
    %c0_34 = arith.constant 0 : index
    %52 = vector.load %arg9[%c0_32, %c0_33, %c0_34] : memref<1x6x128xf32, #tpu.memory_space<vmem>>, vector<1x6x128xf32>
    %53 = vector.shape_cast %52 : vector<1x6x128xf32> to vector<6x128xf32>
    %cst_35 = arith.constant dense<0.000000e+00> : vector<16x128xf32>
    %54 = tpu.matmul %50, %53, %cst_35 {dimension_numbers = #tpu.dot_dimension_numbers<[1], [0], [0], [1], [0, 0, 1, 1], [], []>} : vector<16x6xf32>, vector<6x128xf32>, vector<16x128xf32> -> vector<16x128xf32>
    %55 = arith.addf %51, %54 : vector<16x128xf32>
    %c0_36 = arith.constant 0 : index
    %c0_37 = arith.constant 0 : index
    %56 = vector.load %arg11[%c0_36, %c0_37] : memref<16x128xf32, #tpu.memory_space<vmem>>, vector<16x128xf32>
    tpu.vector_store %arg11[%c0_36, %c0_37], %55 {strides = array<i32>} : memref<16x128xf32, #tpu.memory_space<vmem>>, vector<16x128xf32>,
    %c0_i32_38 = arith.constant 0 : i32
    %57 = arith.cmpi eq, %arg2, %c0_i32_38 : i32
    %58 = arith.extui %57 : i1 to i32
    %c0_i32_39 = arith.constant 0 : i32
    %59 = arith.cmpi ne, %58, %c0_i32_39 : i32
    scf.if %59 {
      %60 = tpu.iota {dimensions = array<i32: 1>} : vector<16x128xi32>
      %c4_i32 = arith.constant 4 : i32
      %61 = vector.broadcast %c4_i32 : i32 to vector<16x128xi32>
      %62 = arith.cmpi slt, %60, %61 : vector<16x128xi32>
      %c0_40 = arith.constant 0 : index
      %c0_41 = arith.constant 0 : index
      %63 = vector.load %arg11[%c0_40, %c0_41] : memref<16x128xf32, #tpu.memory_space<vmem>>, vector<16x128xf32>
      %64 = math.exp %63 : vector<16x128xf32>
      %cst_42 = arith.constant 0.000000e+00 : f32
      %65 = vector.broadcast %cst_42 : f32 to vector<16x128xf32>
      %66 = arith.select %62, %64, %65 : vector<16x128xi1>, vector<16x128xf32>
      %c0_43 = arith.constant 0 : index
      %c0_44 = arith.constant 0 : index
      %c0_45 = arith.constant 0 : index
      %67 = vector.load %arg10[%c0_43, %c0_44, %c0_45] : memref<1x16x128xf32, #tpu.memory_space<vmem>>, vector<1x16x128xf32>
      %68 = vector.shape_cast %67 : vector<1x16x128xf32> to vector<16x128xf32>
      %69 = vector.shape_cast %66 : vector<16x128xf32> to vector<1x16x128xf32>
      tpu.vector_store %arg10[%c0_43, %c0_44, %c0_45], %69 {strides = array<i32>} : memref<1x16x128xf32, #tpu.memory_space<vmem>>, vector<1x16x128xf32>,
    } else {
    }
    return
  }
  func.func @transform_0(%arg0: i32, %arg1: i32, %arg2: i32) -> (i32, i32) {
    %c0_i32 = arith.constant 0 : i32
    %c0_i32_0 = arith.constant 0 : i32
    return %arg1, %c0_i32 : i32, i32
  }
  func.func @transform_1(%arg0: i32, %arg1: i32, %arg2: i32) -> (i32, i32, i32, i32) {
    %c0_i32 = arith.constant 0 : i32
    %c0_i32_0 = arith.constant 0 : i32
    %c0_i32_1 = arith.constant 0 : i32
    return %arg0, %arg2, %c0_i32, %c0_i32_0 : i32, i32, i32, i32
  }
  func.func @transform_2(%arg0: i32, %arg1: i32, %arg2: i32) -> (i32, i32, i32, i32) {
    %c0_i32 = arith.constant 0 : i32
    %c0_i32_0 = arith.constant 0 : i32
    %c0_i32_1 = arith.constant 0 : i32
    return %arg0, %arg2, %c0_i32, %c0_i32_0 : i32, i32, i32, i32
  }
  func.func @transform_3(%arg0: i32, %arg1: i32, %arg2: i32) -> (i32, i32, i32, i32) {
    %c0_i32 = arith.constant 0 : i32
    %c0_i32_0 = arith.constant 0 : i32
    %c0_i32_1 = arith.constant 0 : i32
    return %arg0, %arg2, %c0_i32, %c0_i32_0 : i32, i32, i32, i32
  }
  func.func @transform_4(%arg0: i32, %arg1: i32, %arg2: i32) -> (i32, i32, i32, i32) {
    %c0_i32 = arith.constant 0 : i32
    %c0_i32_0 = arith.constant 0 : i32
    %c0_i32_1 = arith.constant 0 : i32
    return %arg0, %arg2, %c0_i32, %c0_i32_0 : i32, i32, i32, i32
  }
  func.func @transform_5(%arg0: i32, %arg1: i32, %arg2: i32) -> (i32, i32) {
    %c0_i32 = arith.constant 0 : i32
    %c0_i32_0 = arith.constant 0 : i32
    %c0_i32_1 = arith.constant 0 : i32
    return %c0_i32, %c0_i32_0 : i32, i32
  }
  func.func @transform_6(%arg0: i32, %arg1: i32, %arg2: i32) -> (i32, i32, i32) {
    %c0_i32 = arith.constant 0 : i32
    %c0_i32_0 = arith.constant 0 : i32
    %c0_i32_1 = arith.constant 0 : i32
    return %arg2, %c0_i32, %c0_i32_0 : i32, i32, i32
  }
  func.func @transform_7(%arg0: i32, %arg1: i32, %arg2: i32) -> (i32, i32, i32) {
    %c0_i32 = arith.constant 0 : i32
    %c0_i32_0 = arith.constant 0 : i32
    return %arg0, %arg1, %c0_i32 : i32, i32, i32
  }
}

</mosaic_0001>

<llo_original>
// kernel: tpu_custom_call.1
$region0: #{tpu_custom_call.1}
  #allocation0 [shape = 'u32[]', space=smem, size = 0x4, offset = 0x4, fixed_abs, tag = 'smem constant byte address 0x4 - core index']
  #allocation1 [shape = 'u32[144,128]{1,0:T(1,128)}', space=vmem, size = 0x12000, scoped, tag = 'internal scratch']
  #allocation2 [shape = 'f32[16,128]{1,0:T(8,128)}', space=vmem, size = 0x2000, scoped, tag = 'scratch operand']
  %s0 = inlined_call_operand.vmem [shape: bf16[16,32], index: 0, kind: input, shape index: {}]
  %s1 = inlined_call_operand.vmem [shape: bf16[2,1,32,48], index: 1, kind: input, shape index: {}]
  %s2 = inlined_call_operand.vmem [shape: f32[2,1,1,48], index: 2, kind: input, shape index: {}]
  %s3 = inlined_call_operand.vmem [shape: f32[2,1,1,48], index: 3, kind: input, shape index: {}]
  %s4 = inlined_call_operand.vmem [shape: f32[2,1,1,3], index: 4, kind: input, shape index: {}]
  %s5 = inlined_call_operand.vmem [shape: bf16[48,3], index: 5, kind: input, shape index: {}]
  %s6 = inlined_call_operand.vmem [shape: f32[1,6,128], index: 6, kind: input, shape index: {}]
  %s7 = inlined_call_operand.hbm [shape: f32[2,16,128], index: 7, kind: output, shape index: {}]
  %s8 = sld [smem:[#allocation0]]
  $region69: #{tpu_custom_call.1} parent=0
    _
  %s10 = ssub.s32 1, %s8
  %s11 = scalar_select 0, %s10, %s8
  $region1: #{tpu_custom_call.1} parent=0
    #allocation3 [shape = 'u8[16384]{0}', space=vmem, size = 0x4000, scoped, tag = 'output window, operand 0']
    #allocation4 [shape = 's32[2]{0}', space=sflag, size = 0x8, scoped, tag = 'scoped memory for tpu_custom_call.1']
    %12 = vsyncpa [#allocation4], 0
    %s13 = scalar_lea.sflag [#allocation4], 1
    %14 = vsyncpa %s13, 0
    loop: start=0, step=1, limit=4
    $region2: #{tpu_custom_call.1} parent=1 // loop_pre_header
      _
    $region3: #{tpu_custom_call.1} parent=1 // loop_header
      %s16 = sphi 0, %s20
      %p17 = scmp.ge.s32.totalorder %s16, 4
      %s23 = sphi 0, %s42
      %s24 = sphi 0, %s38
      %s25 = sphi 0, %s34
      %s26 = sphi 0, %s23
      %s27 = sphi 0, %s24
      %s28 = sphi 0, %s25
      %s29 = sphi 0, %s26
      %s30 = sphi 0, %s27
      %s31 = sphi 0, %s28
      %s45 = sphi 0, %s47
      %s48 = sphi 0, %s45
      %s49 = sphi 0, %s48
      %s65 = sphi 0, %s49
      %s73 = sphi 0, %s75
      %s76 = sphi 0, %s73
      %s77 = sphi 0, %s76
      %s93 = sphi 0, %s77
      %s101 = sphi 0, %s103
      %s104 = sphi 0, %s101
      %s105 = sphi 0, %s104
      %s121 = sphi 0, %s105
      %s129 = sphi 0, %s131
      %s132 = sphi 0, %s129
      %s133 = sphi 0, %s132
      %s149 = sphi 0, %s133
      %s157 = sphi 0, %s159
      %s160 = sphi 0, %s157
      %s161 = sphi 0, %s160
      %s177 = sphi 0, %s161
      %s181 = sphi 0, %s181
      %s183 = sphi 0, %s181
      %s184 = sphi 0, %s183
      %s198 = sphi 0, %s184
      %s204 = sphi 0, %s206
      %s207 = sphi 0, %s204
      %s208 = sphi 0, %s207
      %s224 = sphi 0, %s208
      %s232 = sphi 0, %s234
      %s235 = sphi 0, %s232
      %s236 = sphi 0, %s235
      %s252 = sphi 0, %s236
    $region4: #{tpu_custom_call.1} parent=1 // loop_header_branch
      %19 = sbr.rel (%p17) target = $region8
    $region5: #{tpu_custom_call.1} parent=1 // loop_body
      %s21 = ssub.s32 %s16, 1
      %s22 = ssub.s32 %s16, 2
      %s32 = sadd.s32 1, %s25
      %p33 = scmp.ge.s32.totalorder %s32, 1
      %s34 = scalar_select %p33, 0, %s32
      %s35 = sadd.s32 1, %s24
      %s36 = scalar_select %p33, %s35, %s24
      %p37 = scmp.ge.s32.totalorder %s36, 1
      %s38 = scalar_select %p37, 0, %s36
      %s39 = sadd.s32 1, %s23
      %s40 = scalar_select %p37, %s39, %s23
      %p41 = scmp.ge.s32.totalorder %s40, 2
      %s42 = scalar_select %p41, 0, %s40
      %s43 = ssub.s32 %s24, %s38
      %p44 = scmp.eq.s32.totalorder %s43, 0
      %s46 = sadd.s32 %s45, 1
      %s47 = scalar_select %p44, %s45, %s46
      %p50 = pneg %p44
      %p51 = scmp.eq.s32.totalorder %s16, 1
      %p52 = por %p50, %p51
      %p53 = scmp.ne.s32.totalorder %s45, %s48
      %p54 = scmp.eq.s32.totalorder %s16, 0
      %p55 = por %p53, %p54
      %p56 = scmp.ne.s32.totalorder %s45, %s48
      %p57 = scmp.eq.s32.totalorder %s21, 1
      %p58 = por %p56, %p57
      %p59 = scmp.ne.s32.totalorder %s48, %s49
      %p60 = scmp.eq.s32.totalorder %s21, 0
      %p61 = por %p59, %p60
      %p62 = scmp.ne.s32.totalorder %s48, %s49
      %p63 = scmp.eq.s32.totalorder %s22, 1
      %p64 = por %p62, %p63
      %p66 = scmp.ne.s32.totalorder %s49, %s65
      %p67 = scmp.eq.s32.totalorder %s22, 0
      %p68 = por %p66, %p67
      %s69 = ssub.s32 %s23, %s42
      %s70 = ssub.s32 %s25, %s34
      %s71 = sor.u32 %s69, %s70
      %p72 = scmp.eq.s32.totalorder %s71, 0
      %s74 = sadd.s32 %s73, 1
      %s75 = scalar_select %p72, %s73, %s74
      %p78 = pneg %p72
      %p79 = scmp.eq.s32.totalorder %s16, 1
      %p80 = por %p78, %p79
      %p81 = scmp.ne.s32.totalorder %s73, %s76
      %p82 = scmp.eq.s32.totalorder %s16, 0
      %p83 = por %p81, %p82
      %p84 = scmp.ne.s32.totalorder %s73, %s76
      %p85 = scmp.eq.s32.totalorder %s21, 1
      %p86 = por %p84, %p85
      %p87 = scmp.ne.s32.totalorder %s76, %s77
      %p88 = scmp.eq.s32.totalorder %s21, 0
      %p89 = por %p87, %p88
      %p90 = scmp.ne.s32.totalorder %s76, %s77
      %p91 = scmp.eq.s32.totalorder %s22, 1
      %p92 = por %p90, %p91
      %p94 = scmp.ne.s32.totalorder %s77, %s93
      %p95 = scmp.eq.s32.totalorder %s22, 0
      %p96 = por %p94, %p95
      %s97 = ssub.s32 %s23, %s42
      %s98 = ssub.s32 %s25, %s34
      %s99 = sor.u32 %s97, %s98
      %p100 = scmp.eq.s32.totalorder %s99, 0
      %s102 = sadd.s32 %s101, 1
      %s103 = scalar_select %p100, %s101, %s102
      %p106 = pneg %p100
      %p107 = scmp.eq.s32.totalorder %s16, 1
      %p108 = por %p106, %p107
      %p109 = scmp.ne.s32.totalorder %s101, %s104
      %p110 = scmp.eq.s32.totalorder %s16, 0
      %p111 = por %p109, %p110
      %p112 = scmp.ne.s32.totalorder %s101, %s104
      %p113 = scmp.eq.s32.totalorder %s21, 1
      %p114 = por %p112, %p113
      %p115 = scmp.ne.s32.totalorder %s104, %s105
      %p116 = scmp.eq.s32.totalorder %s21, 0
      %p117 = por %p115, %p116
      %p118 = scmp.ne.s32.totalorder %s104, %s105
      %p119 = scmp.eq.s32.totalorder %s22, 1
      %p120 = por %p118, %p119
      %p122 = scmp.ne.s32.totalorder %s105, %s121
      %p123 = scmp.eq.s32.totalorder %s22, 0
      %p124 = por %p122, %p123
      %s125 = ssub.s32 %s23, %s42
      %s126 = ssub.s32 %s25, %s34
      %s127 = sor.u32 %s125, %s126
      %p128 = scmp.eq.s32.totalorder %s127, 0
      %s130 = sadd.s32 %s129, 1
      %s131 = scalar_select %p128, %s129, %s130
      %p134 = pneg %p128
      %p135 = scmp.eq.s32.totalorder %s16, 1
      %p136 = por %p134, %p135
      %p137 = scmp.ne.s32.totalorder %s129, %s132
      %p138 = scmp.eq.s32.totalorder %s16, 0
      %p139 = por %p137, %p138
      %p140 = scmp.ne.s32.totalorder %s129, %s132
      %p141 = scmp.eq.s32.totalorder %s21, 1
      %p142 = por %p140, %p141
      %p143 = scmp.ne.s32.totalorder %s132, %s133
      %p144 = scmp.eq.s32.totalorder %s21, 0
      %p145 = por %p143, %p144
      %p146 = scmp.ne.s32.totalorder %s132, %s133
      %p147 = scmp.eq.s32.totalorder %s22, 1
      %p148 = por %p146, %p147
      %p150 = scmp.ne.s32.totalorder %s133, %s149
      %p151 = scmp.eq.s32.totalorder %s22, 0
      %p152 = por %p150, %p151
      %s153 = ssub.s32 %s23, %s42
      %s154 = ssub.s32 %s25, %s34
      %s155 = sor.u32 %s153, %s154
      %p156 = scmp.eq.s32.totalorder %s155, 0
      %s158 = sadd.s32 %s157, 1
      %s159 = scalar_select %p156, %s157, %s158
      %p162 = pneg %p156
      %p163 = scmp.eq.s32.totalorder %s16, 1
      %p164 = por %p162, %p163
      %p165 = scmp.ne.s32.totalorder %s157, %s160
      %p166 = scmp.eq.s32.totalorder %s16, 0
      %p167 = por %p165, %p166
      %p168 = scmp.ne.s32.totalorder %s157, %s160
      %p169 = scmp.eq.s32.totalorder %s21, 1
      %p170 = por %p168, %p169
      %p171 = scmp.ne.s32.totalorder %s160, %s161
      %p172 = scmp.eq.s32.totalorder %s21, 0
      %p173 = por %p171, %p172
      %p174 = scmp.ne.s32.totalorder %s160, %s161
      %p175 = scmp.eq.s32.totalorder %s22, 1
      %p176 = por %p174, %p175
      %p178 = scmp.ne.s32.totalorder %s161, %s177
      %p179 = scmp.eq.s32.totalorder %s22, 0
      %p180 = por %p178, %p179
      %s182 = sadd.s32 %s181, 1
      %p185 = scmp.eq.s32.totalorder %s16, 1
      %p186 = scmp.ne.s32.totalorder %s181, %s183
      %p187 = scmp.eq.s32.totalorder %s16, 0
      %p188 = por %p186, %p187
      %p189 = scmp.ne.s32.totalorder %s181, %s183
      %p190 = scmp.eq.s32.totalorder %s21, 1
      %p191 = por %p189, %p190
      %p192 = scmp.ne.s32.totalorder %s183, %s184
      %p193 = scmp.eq.s32.totalorder %s21, 0
      %p194 = por %p192, %p193
      %p195 = scmp.ne.s32.totalorder %s183, %s184
      %p196 = scmp.eq.s32.totalorder %s22, 1
      %p197 = por %p195, %p196
      %p199 = scmp.ne.s32.totalorder %s184, %s198
      %p200 = scmp.eq.s32.totalorder %s22, 0
      %p201 = por %p199, %p200
      %s202 = ssub.s32 %s25, %s34
      %p203 = scmp.eq.s32.totalorder %s202, 0
      %s205 = sadd.s32 %s204, 1
      %s206 = scalar_select %p203, %s204, %s205
      %p209 = pneg %p203
      %p210 = scmp.eq.s32.totalorder %s16, 1
      %p211 = por %p209, %p210
      %p212 = scmp.ne.s32.totalorder %s204, %s207
      %p213 = scmp.eq.s32.totalorder %s16, 0
      %p214 = por %p212, %p213
      %p215 = scmp.ne.s32.totalorder %s204, %s207
      %p216 = scmp.eq.s32.totalorder %s21, 1
      %p217 = por %p215, %p216
      %p218 = scmp.ne.s32.totalorder %s207, %s208
      %p219 = scmp.eq.s32.totalorder %s21, 0
      %p220 = por %p218, %p219
      %p221 = scmp.ne.s32.totalorder %s207, %s208
      %p222 = scmp.eq.s32.totalorder %s22, 1
      %p223 = por %p221, %p222
      %p225 = scmp.ne.s32.totalorder %s208, %s224
      %p226 = scmp.eq.s32.totalorder %s22, 0
      %p227 = por %p225, %p226
      %s228 = ssub.s32 %s23, %s42
      %s229 = ssub.s32 %s24, %s38
      %s230 = sor.u32 %s228, %s229
      %p231 = scmp.eq.s32.totalorder %s230, 0
      %s233 = sadd.s32 %s232, 1
      %s234 = scalar_select %p231, %s232, %s233
      %p237 = pneg %p231
      %p238 = scmp.eq.s32.totalorder %s16, 1
      %p239 = por %p237, %p238
      %p240 = scmp.ne.s32.totalorder %s232, %s235
      %p241 = scmp.eq.s32.totalorder %s16, 0
      %p242 = por %p240, %p241
      %p243 = scmp.ne.s32.totalorder %s232, %s235
      %p244 = scmp.eq.s32.totalorder %s21, 1
      %p245 = por %p243, %p244
      %p246 = scmp.ne.s32.totalorder %s235, %s236
      %p247 = scmp.eq.s32.totalorder %s21, 0
      %p248 = por %p246, %p247
      %p249 = scmp.ne.s32.totalorder %s235, %s236
      %p250 = scmp.eq.s32.totalorder %s22, 1
      %p251 = por %p249, %p250
      %p253 = scmp.ne.s32.totalorder %s236, %s252
      %p254 = scmp.eq.s32.totalorder %s22, 0
      %p255 = por %p253, %p254
      %p256 = scmp.le.s32.totalorder 1, %s16
      %p257 = scmp.lt.s32.totalorder %s16, 3
      %p258 = pnand %p256, %p257
      %p259 = pneg %p258
      // Predicated region
      $region9: #{tpu_custom_call.1} parent=5 // pred_check
        _
      $region10: #{tpu_custom_call.1} parent=5 // pred_check_branch
        %261 = sbr.rel (%p258) target = $region12
      $region11: #{tpu_custom_call.1} parent=5 // pred_region
        %s262 = ssub.s32 %s16, 1
        // Predicated region
        $region13: #{tpu_custom_call.1} parent=11 // pred_check
          %p263 = pneg %p61
        $region14: #{tpu_custom_call.1} parent=11 // pred_check_branch
          %265 = sbr.rel (%p263) target = $region16
        $region15: #{tpu_custom_call.1} parent=11 // pred_region
          %s266 = smul.u32 2, %s27
          %p267 = scmp.lt.s32.totalorder %s266, 1
          %s268 = scalar_select %p267, %s266, 1
          %s269 = smul.addr %s268, 4
          %s270 = scalar_lea.vmem %s0, %s269
          %s271 = smul.u32 2, %s27
        $region16: #{tpu_custom_call.1} parent=11 // pred_fallthru
          _
        // Predicated region
        $region17: #{tpu_custom_call.1} parent=11 // pred_check
          %p272 = pneg %p194
        $region18: #{tpu_custom_call.1} parent=11 // pred_check_branch
          %274 = sbr.rel (%p272) target = $region20
        $region19: #{tpu_custom_call.1} parent=11 // pred_region
          _
        $region20: #{tpu_custom_call.1} parent=11 // pred_fallthru
          _
        // Predicated region
        $region21: #{tpu_custom_call.1} parent=11 // pred_check
          %p275 = pneg %p220
        $region22: #{tpu_custom_call.1} parent=11 // pred_check_branch
          %277 = sbr.rel (%p275) target = $region24
        $region23: #{tpu_custom_call.1} parent=11 // pred_region
          %p278 = scmp.lt.s32.totalorder %s28, 0
          %s279 = scalar_select %p278, %s28, 0
          %s280 = smul.addr %s279, 8
          %s281 = scalar_lea.vmem %s6, %s280
        $region24: #{tpu_custom_call.1} parent=11 // pred_fallthru
          _
      $region12: #{tpu_custom_call.1} parent=5 // pred_fallthru
        _
      %p282 = scmp.lt.s32.totalorder %s16, 2
      // Predicated region
      $region25: #{tpu_custom_call.1} parent=5 // pred_check
        %p283 = pneg %p282
      $region26: #{tpu_custom_call.1} parent=5 // pred_check_branch
        %285 = sbr.rel (%p283) target = $region28
      $region27: #{tpu_custom_call.1} parent=5 // pred_region
        // Predicated region
        $region29: #{tpu_custom_call.1} parent=27 // pred_check
          %p286 = pneg %p83
        $region30: #{tpu_custom_call.1} parent=27 // pred_check_branch
          %288 = sbr.rel (%p286) target = $region32
        $region31: #{tpu_custom_call.1} parent=27 // pred_region
          %p289 = scmp.lt.s32.totalorder %s23, 1
          %s290 = scalar_select %p289, %s23, 1
          %p291 = scmp.lt.s32.totalorder %s25, 0
          %s292 = scalar_select %p291, %s25, 0
          %s293 = smul.addr %s292, 4
          %s294 = smul.addr %s290, 4
          %s295 = sadd.s32 %s293, %s294
          %s296 = smul.addr %s295, 4
          %s297 = scalar_lea.vmem %s1, %s296
        $region32: #{tpu_custom_call.1} parent=27 // pred_fallthru
          _
        // Predicated region
        $region33: #{tpu_custom_call.1} parent=27 // pred_check
          %p298 = pneg %p111
        $region34: #{tpu_custom_call.1} parent=27 // pred_check_branch
          %300 = sbr.rel (%p298) target = $region36
        $region35: #{tpu_custom_call.1} parent=27 // pred_region
          %p301 = scmp.lt.s32.totalorder %s23, 1
          %s302 = scalar_select %p301, %s23, 1
          %p303 = scmp.lt.s32.totalorder %s25, 0
          %s304 = scalar_select %p303, %s25, 0
          %s305 = sadd.s32 %s304, %s302
          %s306 = scalar_lea.vmem %s2, %s305
        $region36: #{tpu_custom_call.1} parent=27 // pred_fallthru
          _
        // Predicated region
        $region37: #{tpu_custom_call.1} parent=27 // pred_check
          %p307 = pneg %p139
        $region38: #{tpu_custom_call.1} parent=27 // pred_check_branch
          %309 = sbr.rel (%p307) target = $region40
        $region39: #{tpu_custom_call.1} parent=27 // pred_region
          %p310 = scmp.lt.s32.totalorder %s23, 1
          %s311 = scalar_select %p310, %s23, 1
          %p312 = scmp.lt.s32.totalorder %s25, 0
          %s313 = scalar_select %p312, %s25, 0
          %s314 = sadd.s32 %s313, %s311
          %s315 = scalar_lea.vmem %s3, %s314
        $region40: #{tpu_custom_call.1} parent=27 // pred_fallthru
          _
        // Predicated region
        $region41: #{tpu_custom_call.1} parent=27 // pred_check
          %p316 = pneg %p167
        $region42: #{tpu_custom_call.1} parent=27 // pred_check_branch
          %318 = sbr.rel (%p316) target = $region44
        $region43: #{tpu_custom_call.1} parent=27 // pred_region
          %p319 = scmp.lt.s32.totalorder %s23, 1
          %s320 = scalar_select %p319, %s23, 1
          %p321 = scmp.lt.s32.totalorder %s25, 0
          %s322 = scalar_select %p321, %s25, 0
          %s323 = sadd.s32 %s322, %s320
          %s324 = scalar_lea.vmem %s4, %s323
        $region44: #{tpu_custom_call.1} parent=27 // pred_fallthru
          _
      $region28: #{tpu_custom_call.1} parent=5 // pred_fallthru
        _
      %p325 = scmp.le.s32.totalorder 1, %s16
      %p326 = scmp.lt.s32.totalorder %s16, 3
      %p327 = pnand %p325, %p326
      %p328 = pneg %p327
      // Predicated region
      $region45: #{tpu_custom_call.1} parent=5 // pred_check
        _
      $region46: #{tpu_custom_call.1} parent=5 // pred_check_branch
        %330 = sbr.rel (%p327) target = $region48
      $region47: #{tpu_custom_call.1} parent=5 // pred_region
        %s331 = ssub.s32 %s16, 1
        %s332 = smul.u32 2, %s27
        %p333 = scmp.lt.s32.totalorder %s332, 1
        %s334 = scalar_select %p333, %s332, 1
        %s335 = smul.addr %s334, 4
        %s336 = scalar_lea.vmem %s0, %s335
        %p337 = pneg %p61
        %p338 = pneg %p58
        %p339 = scmp.lt.s32.totalorder %s26, 1
        %s340 = scalar_select %p339, %s26, 1
        %p341 = scmp.lt.s32.totalorder %s28, 0
        %s342 = scalar_select %p341, %s28, 0
        %s343 = smul.addr %s342, 4
        %s344 = smul.addr %s340, 4
        %s345 = sadd.s32 %s343, %s344
        %s346 = smul.addr %s345, 4
        %s347 = scalar_lea.vmem %s1, %s346
        %p348 = pneg %p89
        %p349 = pneg %p86
        %p350 = scmp.lt.s32.totalorder %s26, 1
        %s351 = scalar_select %p350, %s26, 1
        %p352 = scmp.lt.s32.totalorder %s28, 0
        %s353 = scalar_select %p352, %s28, 0
        %s354 = sadd.s32 %s353, %s351
        %s355 = scalar_lea.vmem %s2, %s354
        %p356 = pneg %p117
        %p357 = pneg %p114
        %p358 = scmp.lt.s32.totalorder %s26, 1
        %s359 = scalar_select %p358, %s26, 1
        %p360 = scmp.lt.s32.totalorder %s28, 0
        %s361 = scalar_select %p360, %s28, 0
        %s362 = sadd.s32 %s361, %s359
        %s363 = scalar_lea.vmem %s3, %s362
        %p364 = pneg %p145
        %p365 = pneg %p142
        %p366 = scmp.lt.s32.totalorder %s26, 1
        %s367 = scalar_select %p366, %s26, 1
        %p368 = scmp.lt.s32.totalorder %s28, 0
        %s369 = scalar_select %p368, %s28, 0
        %s370 = sadd.s32 %s369, %s367
        %s371 = scalar_lea.vmem %s4, %s370
        %p372 = pneg %p173
        %p373 = pneg %p170
        %p374 = pneg %p194
        %p375 = pneg %p191
        %p376 = scmp.lt.s32.totalorder %s28, 0
        %s377 = scalar_select %p376, %s28, 0
        %s378 = smul.addr %s377, 8
        %s379 = scalar_lea.vmem %s6, %s378
        %p380 = pneg %p220
        %p381 = pneg %p217
        %p382 = pneg %p248
        %p383 = pneg %p245
        %s384 = sand.u32 %s235, 1
        %s385 = scalar_lea.sflag [#allocation4], %s384
        %s386 = sand.u32 %s235, 1
        %s387 = smul.addr %s386, 16
        %s388 = scalar_lea.vmem [#allocation3], %s387
        %s389 = smul.u32 2, %s27
        %p390 = scmp.lt.s32.totalorder %s389, 1
        %s391 = scalar_select %p390, %s389, 1
        %s392 = smul.addr %s391, 4
        %s393 = scalar_lea.vmem %s0, %s392
        %s394 = smul.u32 2, %s27
        %p395 = scmp.lt.s32.totalorder %s26, 1
        %s396 = scalar_select %p395, %s26, 1
        %p397 = scmp.lt.s32.totalorder %s28, 0
        %s398 = scalar_select %p397, %s28, 0
        %s399 = smul.addr %s398, 4
        %s400 = smul.addr %s396, 4
        %s401 = sadd.s32 %s399, %s400
        %s402 = smul.addr %s401, 4
        %s403 = scalar_lea.vmem %s1, %s402
        %p404 = scmp.lt.s32.totalorder %s26, 1
        %s405 = scalar_select %p404, %s26, 1
        %p406 = scmp.lt.s32.totalorder %s28, 0
        %s407 = scalar_select %p406, %s28, 0
        %s408 = sadd.s32 %s407, %s405
        %s409 = scalar_lea.vmem %s2, %s408
        %p410 = scmp.lt.s32.totalorder %s26, 1
        %s411 = scalar_select %p410, %s26, 1
        %p412 = scmp.lt.s32.totalorder %s28, 0
        %s413 = scalar_select %p412, %s28, 0
        %s414 = sadd.s32 %s413, %s411
        %s415 = scalar_lea.vmem %s3, %s414
        %p416 = scmp.lt.s32.totalorder %s26, 1
        %s417 = scalar_select %p416, %s26, 1
        %p418 = scmp.lt.s32.totalorder %s28, 0
        %s419 = scalar_select %p418, %s28, 0
        %s420 = sadd.s32 %s419, %s417
        %s421 = scalar_lea.vmem %s4, %s420
        %p422 = scmp.lt.s32.totalorder %s28, 0
        %s423 = scalar_select %p422, %s28, 0
        %s424 = smul.addr %s423, 8
        %s425 = scalar_lea.vmem %s6, %s424
        %s426 = smul.u32 2, %s27
        %p428 = scmp.eq.s32.totalorder %s28, 0
        // Predicated region
        $region49: #{tpu_custom_call.1} parent=47 // pred_check
          %p429 = pneg %p428
        $region50: #{tpu_custom_call.1} parent=47 // pred_check_branch
          %431 = sbr.rel (%p429) target = $region52
        $region51: #{tpu_custom_call.1} parent=47 // pred_region
          %432 = vst [vmem:[#allocation2] sm:$0xff] 0.0
          %433 = vst [vmem:[#allocation2 + $0x8] sm:$0xff] 0.0
        $region52: #{tpu_custom_call.1} parent=47 // pred_fallthru
          _
        %v434 = vld [vmem:[%s393] sm:$0xf]
        %v435 = vld [vmem:[%s393 + $0x4] sm:$0xf]
        %v436 = vld [vmem:[%s403] sm:$0xf]
        %v437 = vld [vmem:[%s403 + $0x4] sm:$0xf]
        %v438 = vld [vmem:[%s403 + $0x8] sm:$0xf]
        %v439 = vld [vmem:[%s403 + $0xc] sm:$0xf]
        %v440 = vld [vmem:[%s409] sm:$0x1]
        %v442 = vlaneseq
        %v443 = vshrl.u32 %v442, 7
        %v444 = vsub.s32 0, %v443
        %v445 = vrot.slane %v440, %v444
        %v449 = vunpack.c.l.b16 %v434
        %v450 = vunpack.c.l.b16 %v435
        %v451 = vpack.c.b16 %v450, %v449
        %v456 = vunpack.c.l.b16 %v436
        %v457 = vunpack.c.l.b16 %v437
        %v458 = vunpack.c.l.b16 %v438
        %v459 = vunpack.c.l.b16 %v439
        %v460 = vpack.c.b16 %v457, %v456
        %v461 = vpack.c.b16 %v459, %v458
        %vm464 = vcmask 261120
        %v466 = vsel %vm464, %v451, 0
        %468 = vmatprep.subr.bf16.mxu0 0
        %469 = vmatpush1.bf16.msra.mxu0 %v460
        %470 = vmatprep.subr.bf16.mxu0 0
        %471 = vmatpush1.bf16.msra.mxu0 %v461
        %472 = vmatprep.subr.bf16.mxu0 0
        %473 = vmatpush1.bf16.msra.mxu0 0
        %474 = vmatprep.subr.bf16.mxu0 0
        %475 = vmatpush1.bf16.msra.mxu0 0
        %476 = vmatprep.subr.bf16.mxu0 0
        %477 = vmatpush1.bf16.msra.mxu0 0
        %478 = vmatprep.subr.bf16.mxu0 0
        %479 = vmatpush1.bf16.msra.mxu0 0
        %480 = vmatprep.subr.bf16.mxu0 0
        %481 = vmatpush1.bf16.msra.mxu0 0
        %482 = vmatprep.subr.bf16.mxu0 0
        %483 = vmatpush1.bf16.msra.mxu0 0
        %484 = vmatprep.subr.bf16.mxu0 0
        %485 = vmatpush1.bf16.msra.mxu0 0
        %486 = vmatprep.subr.bf16.mxu0 0
        %487 = vmatpush1.bf16.msra.mxu0 0
        %488 = vmatprep.subr.bf16.mxu0 0
        %489 = vmatpush1.bf16.msra.mxu0 0
        %490 = vmatprep.subr.bf16.mxu0 0
        %491 = vmatpush1.bf16.msra.mxu0 0
        %492 = vmatprep.subr.bf16.mxu0 0
        %493 = vmatpush1.bf16.msra.mxu0 0
        %494 = vmatprep.subr.bf16.mxu0 0
        %495 = vmatpush1.bf16.msra.mxu0 0
        %496 = vmatprep.subr.bf16.mxu0 0
        %497 = vmatpush1.bf16.msra.mxu0 0
        %498 = vmatprep.subr.bf16.mxu0 0
        %499 = vmatpush1.bf16.msra.mxu0 0
        %500 = vmatprep.mubr.bf16.mxu0 0
        %501 = vmatmul.mubr.bf16.gmra.mrb[0].mxu0 %v466
        %v502 = vpop.f32.mrb[0].mxu0
        %v503 = vadd.f32 %v445, %v502
        %v504 = vpop.f32.mrb[0].mxu0
        %v505 = vpop.f32.mrb[0].mxu0
        %v506 = vadd.f32 %v445, %v505
        %v507 = vpop.f32.mrb[0].mxu0
        %508 = vdwg.mxu0
        %v509 = vmul.f32 %v503, 0.5
        %v510 = vmul.f32 %v506, 0.5
        %v511 = vmul.f32 %v503, 0.044715
        %v512 = vmul.f32 %v506, 0.044715
        %v513 = vmul.f32 %v511, %v503
        %v514 = vmul.f32 %v512, %v506
        %v515 = vmul.f32 %v513, %v503
        %v516 = vmul.f32 %v514, %v506
        %v517 = vadd.f32 %v503, %v515
        %v518 = vadd.f32 %v506, %v516
        %v519 = vmul.f32 %v517, 0.7978846
        %v520 = vmul.f32 %v518, 0.7978846
        %v521 = vtanh.pop %v519
        %v522 = vtanh.pop %v520
        %v523 = vadd.f32 %v521, 1.0
        %v524 = vadd.f32 %v522, 1.0
        %v525 = vmul.f32 %v509, %v523
        %v526 = vmul.f32 %v510, %v524
        %v527 = vld [vmem:[%s415] sm:$0x1]
        %v529 = vlaneseq
        %v530 = vshrl.u32 %v529, 7
        %v531 = vsub.s32 0, %v530
        %v532 = vrot.slane %v527, %v531
        %v534 = vmul.f32 %v525, %v532
        %v535 = vmul.f32 %v526, %v532
        %v536 = vpack.c.bf16 %v535, %v534
        %v537 = vld [vmem:[%s5] sm:$0xf]
        %v538 = vld [vmem:[%s5 + $0x4] sm:$0xf]
        %v539 = vld [vmem:[%s5 + $0x8] sm:$0xf]
        %v540 = vld [vmem:[%s5 + $0xc] sm:$0xf]
        %v541 = vld [vmem:[%s5 + $0x10] sm:$0xf]
        %v542 = vld [vmem:[%s5 + $0x14] sm:$0xf]
        %v543 = vld [vmem:[%s421] sm:$0x1]
        %v545 = vlaneseq
        %v546 = vshrl.u32 %v545, 7
        %v547 = vsub.s32 0, %v546
        %v548 = vrot.slane %v543, %v547
        %v556 = vunpack.c.l.b16 %v537
        %v557 = vunpack.c.l.b16 %v538
        %v558 = vunpack.c.l.b16 %v539
        %v559 = vunpack.c.l.b16 %v540
        %v560 = vunpack.c.l.b16 %v541
        %v561 = vunpack.c.l.b16 %v542
        %v562 = vpack.c.b16 %v557, %v556
        %v563 = vpack.c.b16 %v559, %v558
        %v564 = vpack.c.b16 %v561, %v560
        %vm568 = vcmask 392192
        %v570 = vsel %vm568, %v536, 0
        %572 = vmatprep.subr.bf16.mxu0 0
        %573 = vmatpush1.bf16.msra.mxu0 %v562
        %574 = vmatprep.subr.bf16.mxu0 0
        %575 = vmatpush1.bf16.msra.mxu0 %v563
        %576 = vmatprep.subr.bf16.mxu0 0
        %577 = vmatpush1.bf16.msra.mxu0 %v564
        %578 = vmatprep.subr.bf16.mxu0 0
        %579 = vmatpush1.bf16.msra.mxu0 0
        %580 = vmatprep.subr.bf16.mxu0 0
        %581 = vmatpush1.bf16.msra.mxu0 0
        %582 = vmatprep.subr.bf16.mxu0 0
        %583 = vmatpush1.bf16.msra.mxu0 0
        %584 = vmatprep.subr.bf16.mxu0 0
        %585 = vmatpush1.bf16.msra.mxu0 0
        %586 = vmatprep.subr.bf16.mxu0 0
        %587 = vmatpush1.bf16.msra.mxu0 0
        %588 = vmatprep.subr.bf16.mxu0 0
        %589 = vmatpush1.bf16.msra.mxu0 0
        %590 = vmatprep.subr.bf16.mxu0 0
        %591 = vmatpush1.bf16.msra.mxu0 0
        %592 = vmatprep.subr.bf16.mxu0 0
        %593 = vmatpush1.bf16.msra.mxu0 0
        %594 = vmatprep.subr.bf16.mxu0 0
        %595 = vmatpush1.bf16.msra.mxu0 0
        %596 = vmatprep.subr.bf16.mxu0 0
        %597 = vmatpush1.bf16.msra.mxu0 0
        %598 = vmatprep.subr.bf16.mxu0 0
        %599 = vmatpush1.bf16.msra.mxu0 0
        %600 = vmatprep.subr.bf16.mxu0 0
        %601 = vmatpush1.bf16.msra.mxu0 0
        %602 = vmatprep.subr.bf16.mxu0 0
        %603 = vmatpush1.bf16.msra.mxu0 0
        %604 = vmatprep.mubr.bf16.mxu0 0
        %605 = vmatmul.mubr.bf16.gmra.mrb[0].mxu0 %v570
        %v606 = vpop.f32.mrb[0].mxu0
        %v607 = vadd.f32 %v548, %v606
        %v608 = vpop.f32.mrb[0].mxu0
        %v609 = vpop.f32.mrb[0].mxu0
        %v610 = vadd.f32 %v548, %v609
        %v611 = vpop.f32.mrb[0].mxu0
        %612 = vdwg.mxu0
        %v613 = vand.u32 2147483647, %v607
        %v614 = vand.u32 2147483647, %v610
        %v615 = vsub.f32 0.0, %v613
        %v616 = vsub.f32 0.0, %v614
        %v617 = vmul.f32 %v615, 1.442695
        %v618 = vpow.pop %v617
        %v619 = vmul.f32 %v616, 1.442695
        %v620 = vpow.pop %v619
        %v621 = vadd.f32 %v618, 1.0
        %v622 = vadd.f32 %v620, 1.0
        %v623 = vlog2.pop %v621
        %v624 = vmul.f32 %v623, 0.6931472
        %v625 = vlog2.pop %v622
        %v626 = vmul.f32 %v625, 0.6931472
        %v627 = vmin.f32 %v607, 0.0
        %v628 = vmin.f32 %v610, 0.0
        %v629 = vsub.f32 %v627, %v624
        %v630 = vsub.f32 %v628, %v626
        %v631 = vsub.f32 0.0, %v607
        %v632 = vsub.f32 0.0, %v610
        %v633 = vmin.f32 %v631, 0.0
        %v634 = vmin.f32 %v632, 0.0
        %v635 = vsub.f32 %v633, %v624
        %v636 = vsub.f32 %v634, %v626
        %639 = vrot.lane.b32.xlu0 %v635, 3
        %v640 = vpop.permute.xlu0 %639
        %641 = vrot.lane.b32.xlu0 %v636, 3
        %v642 = vpop.permute.xlu0 %641
        %vm645 = vcmask 23552
        %v646 = vsel %vm645, %v629, %v640
        %v647 = vsel %vm645, %v630, %v642
        %v648 = vld [vmem:[#allocation2] sm:$0xff]
        %v649 = vld [vmem:[#allocation2 + $0x8] sm:$0xff]
        %v650 = vld [vmem:[%s425] sm:$0x3f]
        %vm651 = vcmask 48128
        %v653 = vsel %vm651, %v646, 0
        %v656 = vsel %vm651, %v647, 0
        %vm658 = vcmask 1045504
        %v660 = vsel %vm658, %v650, 0
        %662 = vmatprep.subr.mxu0 0.0
        %663 = vmatpush1.msra.mxu0 %v660
        %664 = vmatprep.subr.mxu0 0.0
        %665 = vmatpush1.msra.mxu0 0.0
        %666 = vmatprep.subr.mxu0 0.0
        %667 = vmatpush1.msra.mxu0 0.0
        %668 = vmatprep.subr.mxu0 0.0
        %669 = vmatpush1.msra.mxu0 0.0
        %670 = vmatprep.subr.mxu0 0.0
        %671 = vmatpush1.msra.mxu0 0.0
        %672 = vmatprep.subr.mxu0 0.0
        %673 = vmatpush1.msra.mxu0 0.0
        %674 = vmatprep.subr.mxu0 0.0
        %675 = vmatpush1.msra.mxu0 0.0
        %676 = vmatprep.subr.mxu0 0.0
        %677 = vmatpush1.msra.mxu0 0.0
        %678 = vmatprep.subr.mxu0 0.0
        %679 = vmatpush1.msra.mxu0 0.0
        %680 = vmatprep.subr.mxu0 0.0
        %681 = vmatpush1.msra.mxu0 0.0
        %682 = vmatprep.subr.mxu0 0.0
        %683 = vmatpush1.msra.mxu0 0.0
        %684 = vmatprep.subr.mxu0 0.0
        %685 = vmatpush1.msra.mxu0 0.0
        %686 = vmatprep.subr.mxu0 0.0
        %687 = vmatpush1.msra.mxu0 0.0
        %688 = vmatprep.subr.mxu0 0.0
        %689 = vmatpush1.msra.mxu0 0.0
        %690 = vmatprep.subr.mxu0 0.0
        %691 = vmatpush1.msra.mxu0 0.0
        %692 = vmatprep.subr.mxu0 0.0
        %693 = vmatpush1.msra.mxu0 0.0
        %694 = vmatprep.subr.mxu0 0.0
        %695 = vmatpush1.msra.mxu0 0.0
        %696 = vmatprep.subr.mxu0 0.0
        %697 = vmatpush1.msra.mxu0 0.0
        %698 = vmatprep.subr.mxu0 0.0
        %699 = vmatpush1.msra.mxu0 0.0
        %700 = vmatprep.subr.mxu0 0.0
        %701 = vmatpush1.msra.mxu0 0.0
        %702 = vmatprep.subr.mxu0 0.0
        %703 = vmatpush1.msra.mxu0 0.0
        %704 = vmatprep.subr.mxu0 0.0
        %705 = vmatpush1.msra.mxu0 0.0
        %706 = vmatprep.subr.mxu0 0.0
        %707 = vmatpush1.msra.mxu0 0.0
        %708 = vmatprep.subr.mxu0 0.0
        %709 = vmatpush1.msra.mxu0 0.0
        %710 = vmatprep.subr.mxu0 0.0
        %711 = vmatpush1.msra.mxu0 0.0
        %712 = vmatprep.subr.mxu0 0.0
        %713 = vmatpush1.msra.mxu0 0.0
        %714 = vmatprep.subr.mxu0 0.0
        %715 = vmatpush1.msra.mxu0 0.0
        %716 = vmatprep.subr.mxu0 0.0
        %717 = vmatpush1.msra.mxu0 0.0
        %718 = vmatprep.subr.mxu0 0.0
        %719 = vmatpush1.msra.mxu0 0.0
        %720 = vmatprep.subr.mxu0 0.0
        %721 = vmatpush1.msra.mxu0 0.0
        %722 = vmatprep.subr.mxu0 0.0
        %723 = vmatpush1.msra.mxu0 0.0
        %724 = vmatprep.subr.mxu0 0.0
        %725 = vmatpush1.msra.mxu0 0.0
        %726 = vmatprep.mubr.f32.mxu0 0.0
        %727 = vmatmul.mubr.f32.gmra.mrb[0].mxu0 %v653
        %v728 = vpop.f32.mrb[0].mxu0
        %v729 = vadd.f32 0.0, %v728
        %v730 = vpop.f32.mrb[0].mxu0
        %731 = vmatprep.mubr.f32.mxu0 0.0
        %732 = vmatmul.mubr.f32.gmra.mrb[0].mxu0 %v656
        %v733 = vpop.f32.mrb[0].mxu0
        %v734 = vadd.f32 0.0, %v733
        %v735 = vpop.f32.mrb[0].mxu0
        %736 = vdwg.mxu0
        %v737 = vadd.f32 %v648, %v729
        %v738 = vadd.f32 %v649, %v734
        %739 = vst [vmem:[#allocation2] sm:$0xff] %v737
        %740 = vst [vmem:[#allocation2 + $0x8] sm:$0xff] %v738
        // Predicated region
        $region53: #{tpu_custom_call.1} parent=47 // pred_check
          %p741 = pneg %p428
        $region54: #{tpu_custom_call.1} parent=47 // pred_check_branch
          %743 = sbr.rel (%p741) target = $region56
        $region55: #{tpu_custom_call.1} parent=47 // pred_region
          %v744 = vlaneseq
          %v745 = vand.u32 %v744, 127
          %vm746 = vcmp.lt.s32.totalorder %v745, 4
          %v747 = vld [vmem:[#allocation2] sm:$0xff]
          %v748 = vld [vmem:[#allocation2 + $0x8] sm:$0xff]
          %v749 = vmul.f32 %v747, 1.442695
          %v750 = vpow.pop %v749
          %v751 = vmul.f32 %v748, 1.442695
          %v752 = vpow.pop %v751
          %v753 = vsel %vm746, %v750, 0.0
          %v754 = vsel %vm746, %v752, 0.0
          %755 = vst [vmem:[%s388] sm:$0xff] %v753
          %756 = vst [vmem:[%s388 + $0x8] sm:$0xff] %v754
        $region56: #{tpu_custom_call.1} parent=47 // pred_fallthru
          _
        %s757 = sand.u32 %s235, 1
        %s758 = scalar_lea.sflag [#allocation4], %s757
        %s759 = sand.u32 %s235, 1
        %s760 = smul.addr %s759, 16
        %s761 = scalar_lea.vmem [#allocation3], %s760
        // Predicated region
        $region57: #{tpu_custom_call.1} parent=47 // pred_check
          %p762 = pneg %p245
        $region58: #{tpu_custom_call.1} parent=47 // pred_check_branch
          %764 = sbr.rel (%p762) target = $region60
        $region59: #{tpu_custom_call.1} parent=47 // pred_region
          %s765 = smul.u32 2, %s27
          %s767 = ssub.s32 256, 256
          %768 = vsyncadd %s758, %s767
          %s769 = smul.addr %s26, 2
          %s770 = sadd.s32 %s765, %s769
          %s771 = smul.addr %s770, 128
          %s772 = scalar_lea.hbm %s7, %s771
          %s773 = sshll.u32 %s761, 4
          %s774 = int_to_ptr.vmem [resolvable:$true] %s773
          %779 = dma.vmem_to_hbm [thread:$0]  %s774, 256, %s772, %s758, 128, 128, 8
        $region60: #{tpu_custom_call.1} parent=47 // pred_fallthru
          _
      $region48: #{tpu_custom_call.1} parent=5 // pred_fallthru
        _
      %p780 = scmp.le.s32.totalorder 2, %s16
      // Predicated region
      $region61: #{tpu_custom_call.1} parent=5 // pred_check
        %p781 = pneg %p780
      $region62: #{tpu_custom_call.1} parent=5 // pred_check_branch
        %783 = sbr.rel (%p781) target = $region64
      $region63: #{tpu_custom_call.1} parent=5 // pred_region
        %s784 = ssub.s32 %s16, 2
        // Predicated region
        $region65: #{tpu_custom_call.1} parent=63 // pred_check
          %p785 = pneg %p251
        $region66: #{tpu_custom_call.1} parent=63 // pred_check_branch
          %787 = sbr.rel (%p785) target = $region68
        $region67: #{tpu_custom_call.1} parent=63 // pred_region
          %s788 = sand.u32 %s236, 1
          %s789 = scalar_lea.sflag [#allocation4], %s788
          %s790 = sand.u32 %s236, 1
          %s791 = smul.addr %s790, 16
          %s792 = scalar_lea.vmem [#allocation3], %s791
          %793 = dma.done %s789, 256
        $region68: #{tpu_custom_call.1} parent=63 // pred_fallthru
          _
      $region64: #{tpu_custom_call.1} parent=5 // pred_fallthru
        _
    $region6: #{tpu_custom_call.1} parent=1 // loop_footer
      %s20 = sadd.s32 1, %s16
    $region7: #{tpu_custom_call.1} parent=1 // loop_footer_branch
      %15 = sbr.rel target = $region3
    $region8: #{tpu_custom_call.1} parent=1 // loop_exit
      _
    %794 = vsyncpa [#allocation4], 1
    %s795 = scalar_lea.sflag [#allocation4], 1
    %796 = vsyncpa %s795, 1

</llo_original>
